<compile_context>
chip_gen: v5e
topology: v5e:2x2
jax: 0.10.0
libtpu: 0.0.40
codegen_flags: <defaults>
</compile_context>

<pallas_src>
import jax
import jax.numpy as jnp
from jax.experimental import pallas as pl
from jax.experimental.pallas import tpu as pltpu


_TINY_BYTES = 512 * 1024        # below this, run the whole tensor in one step
_STEP_BYTES = 4 * 1024 * 1024   # per-step slab target (x2 when double-buffered)


def motion_fusion_kernel(vis_ref, mot_ref, out_ref):
    # vis_ref: (Bb, 3, R, L)   mot_ref: (Bb, 2, R, L)   out_ref: (Bb, 3, R, L)
    out_ref[:, 0:1] = vis_ref[:, 0:1].astype(out_ref.dtype)
    out_ref[:, 1:3] = (mot_ref[:, 0:2] * vis_ref[:, 1:3]).astype(out_ref.dtype)


def motion_fusion(vis, mot):
    """vis: (B, >=3, H, W), mot: (B, >=2, H, W) -> (B, 3, H, W)."""
    B, Cv, H, W = vis.shape
    Bm, Cm, Hm, Wm = mot.shape
    assert Cv >= 3, f"vis needs >=3 channels, got {Cv}"
    assert Cm >= 2, f"mot needs >=2 channels, got {Cm}"
    assert (Bm, Hm, Wm) == (B, H, W), (
        f"batch/spatial mismatch: vis {vis.shape} vs mot {mot.shape}"
    )

    out_dtype = vis.dtype
    itemsize = vis.dtype.itemsize
    HW = H * W

    # Lane-dense view of the spatial dims (free reshape, no channel slicing).
    if HW % 128 == 0:
        rows, L = HW // 128, 128
        vis_v = vis.reshape(B, Cv, rows, L)
        mot_v = mot.reshape(B, Cm, rows, L)
    else:
        rows, L = H, W  # small/odd shapes: full-extent trailing block
        vis_v, mot_v = vis, mot

    # 3 vis + 2 mot channel planes read, 3 planes written => 8 planes per row.
    bytes_per_row = 8 * L * itemsize

    if B * rows * bytes_per_row <= _TINY_BYTES:
        # Tiny tensor: single grid step over everything (batch in the block).
        Bb, R = B, rows
    else:
        Bb = 1
        r_budget = max(8, (_STEP_BYTES // bytes_per_row) // 8 * 8)
        R = rows if rows <= r_budget else r_budget
        if B * pl.cdiv(rows, R) < 2 and rows >= 16:
            # Ensure >=2 parallel steps so v7x megacore uses both cores.
            R = (((rows + 1) // 2) + 7) // 8 * 8

    n_b = pl.cdiv(B, Bb)
    n_r = pl.cdiv(rows, R)

    out = pl.pallas_call(
        motion_fusion_kernel,
        out_shape=jax.ShapeDtypeStruct((B, 3, rows, L), out_dtype),
        grid_spec=pl.GridSpec(
            grid=(n_b, n_r),
            in_specs=[
                # Channel block pinned to block 0 -> channels 0..2 of vis.
                pl.BlockSpec((Bb, 3, R, L), lambda b, r: (b, 0, r, 0)),
                # Channel block pinned to block 0 -> channels 0..1 of mot.
                pl.BlockSpec((Bb, 2, R, L), lambda b, r: (b, 0, r, 0)),
            ],
            out_specs=pl.BlockSpec((Bb, 3, R, L), lambda b, r: (b, 0, r, 0)),
        ),
        compiler_params=pltpu.CompilerParams(
            dimension_semantics=("parallel", "parallel"),
        ),
    )(vis_v, mot_v)
    return out.reshape(B, 3, H, W)


def _reference(vis, mot):
    return jnp.stack(
        [vis[:, 0], mot[:, 0] * vis[:, 1], mot[:, 1] * vis[:, 2]], axis=1
    )


if __name__ == "__main__":
    key = jax.random.PRNGKey(0)
    k1, k2, k3, k4, k5, k6 = jax.random.split(key, 6)

    # Case 1: exact channel counts, small spatial, HW multiple of 128
    # (lane-dense path, whole tensor in one grid step).
    B, H, W = 2, 16, 16
    vis = jax.random.normal(k1, (B, 3, H, W), dtype=jnp.float32)
    mot = jax.random.normal(k2, (B, 2, H, W), dtype=jnp.float32)
    out = jax.block_until_ready(motion_fusion(vis, mot))
    assert out.shape == (B, 3, H, W)
    assert jnp.allclose(out, _reference(vis, mot), atol=1e-6), "mismatch (case 1)"

    # Case 2: extra input channels (channel selection via BlockSpec, no
    # wrapper slice copy) and HW not a multiple of 128 (full-extent block).
    B2, H2, W2 = 2, 24, 24
    vis2 = jax.random.normal(k3, (B2, 4, H2, W2), dtype=jnp.float32)
    mot2 = jax.random.normal(k4, (B2, 3, H2, W2), dtype=jnp.float32)
    out2 = jax.block_until_ready(motion_fusion(vis2, mot2))
    assert out2.shape == (B2, 3, H2, W2)
    assert jnp.allclose(out2, _reference(vis2, mot2), atol=1e-6), "mismatch (case 2)"

    # Case 3: single-batch, larger spatial -> exercises the row-tiled path
    # (>=2 parallel grid steps).
    B3, H3, W3 = 1, 64, 384
    vis3 = jax.random.normal(k5, (B3, 3, H3, W3), dtype=jnp.float32)
    mot3 = jax.random.normal(k6, (B3, 2, H3, W3), dtype=jnp.float32)
    out3 = jax.block_until_ready(motion_fusion(vis3, mot3))
    assert out3.shape == (B3, 3, H3, W3)
    assert jnp.allclose(out3, _reference(vis3, mot3), atol=1e-6), "mismatch (case 3)"

    print("KERNEL_OK")
</pallas_src>

<mosaic_0001>
module attributes {stable_mosaic.version = 11 : i64} {
  func.func @motion_fusion_kernel(%arg0: i32, %arg1: i32, %arg2: memref<2x3x2x128xf32, #tpu.memory_space<vmem>>, %arg3: memref<2x2x2x128xf32, #tpu.memory_space<vmem>>, %arg4: memref<2x3x2x128xf32, #tpu.memory_space<vmem>>) attributes {dimension_semantics = [#tpu.dimension_semantics<parallel>, #tpu.dimension_semantics<parallel>], iteration_bounds = array<i64: 1, 1>, scalar_prefetch = 0 : i64, scratch_operands = 0 : i64, tpu.core_type = #tpu.core_type<tc>, window_params = [{transform_indices = @transform_0, window_bounds = array<i64: 2, 3, 2, 128>}, {transform_indices = @transform_1, window_bounds = array<i64: 2, 2, 2, 128>}, {transform_indices = @transform_2, window_bounds = array<i64: 2, 3, 2, 128>}]} {
    %c0 = arith.constant 0 : index
    %c0_0 = arith.constant 0 : index
    %c0_1 = arith.constant 0 : index
    %c0_2 = arith.constant 0 : index
    %0 = vector.load %arg2[%c0, %c0_0, %c0_1, %c0_2] : memref<2x3x2x128xf32, #tpu.memory_space<vmem>>, vector<2x1x2x128xf32>
    %c0_3 = arith.constant 0 : index
    %c0_4 = arith.constant 0 : index
    %c0_5 = arith.constant 0 : index
    %c0_6 = arith.constant 0 : index
    %1 = vector.load %arg4[%c0_3, %c0_4, %c0_5, %c0_6] : memref<2x3x2x128xf32, #tpu.memory_space<vmem>>, vector<2x1x2x128xf32>
    tpu.vector_store %arg4[%c0_3, %c0_4, %c0_5, %c0_6], %0 {strides = array<i32>} : memref<2x3x2x128xf32, #tpu.memory_space<vmem>>, vector<2x1x2x128xf32>,
    %c0_7 = arith.constant 0 : index
    %c0_8 = arith.constant 0 : index
    %c0_9 = arith.constant 0 : index
    %c0_10 = arith.constant 0 : index
    %2 = vector.load %arg3[%c0_7, %c0_8, %c0_9, %c0_10] : memref<2x2x2x128xf32, #tpu.memory_space<vmem>>, vector<2x2x2x128xf32>
    %c0_11 = arith.constant 0 : index
    %c1 = arith.constant 1 : index
    %c0_12 = arith.constant 0 : index
    %c0_13 = arith.constant 0 : index
    %3 = vector.load %arg2[%c0_11, %c1, %c0_12, %c0_13] : memref<2x3x2x128xf32, #tpu.memory_space<vmem>>, vector<2x2x2x128xf32>
    %4 = arith.mulf %2, %3 : vector<2x2x2x128xf32>
    %c0_14 = arith.constant 0 : index
    %c1_15 = arith.constant 1 : index
    %c0_16 = arith.constant 0 : index
    %c0_17 = arith.constant 0 : index
    %5 = vector.load %arg4[%c0_14, %c1_15, %c0_16, %c0_17] : memref<2x3x2x128xf32, #tpu.memory_space<vmem>>, vector<2x2x2x128xf32>
    tpu.vector_store %arg4[%c0_14, %c1_15, %c0_16, %c0_17], %4 {strides = array<i32>} : memref<2x3x2x128xf32, #tpu.memory_space<vmem>>, vector<2x2x2x128xf32>,
    return
  }
  func.func @transform_0(%arg0: i32, %arg1: i32) -> (i32, i32, i32, i32) {
    %c0_i32 = arith.constant 0 : i32
    %c0_i32_0 = arith.constant 0 : i32
    %c0_i32_1 = arith.constant 0 : i32
    return %arg0, %c0_i32, %arg1, %c0_i32_0 : i32, i32, i32, i32
  }
  func.func @transform_1(%arg0: i32, %arg1: i32) -> (i32, i32, i32, i32) {
    %c0_i32 = arith.constant 0 : i32
    %c0_i32_0 = arith.constant 0 : i32
    %c0_i32_1 = arith.constant 0 : i32
    return %arg0, %c0_i32, %arg1, %c0_i32_0 : i32, i32, i32, i32
  }
  func.func @transform_2(%arg0: i32, %arg1: i32) -> (i32, i32, i32, i32) {
    %c0_i32 = arith.constant 0 : i32
    %c0_i32_0 = arith.constant 0 : i32
    %c0_i32_1 = arith.constant 0 : i32
    return %arg0, %c0_i32, %arg1, %c0_i32_0 : i32, i32, i32, i32
  }
}

</mosaic_0001>

<llo_original>
// kernel: tpu_custom_call.1
$region0: #{tpu_custom_call.1}
  #allocation0 [shape = 'u32[]', space=smem, size = 0x4, offset = 0x4, fixed_abs, tag = 'smem constant byte address 0x4 - core index']
  #allocation1 [shape = 'u32[72,128]{1,0:T(1,128)}', space=vmem, size = 0x9000, scoped, tag = 'internal scratch']
  %s0 = inlined_call_operand.hbm [shape: f32[2,3,2,128], index: 0, kind: input, shape index: {}]
  %s1 = inlined_call_operand.hbm [shape: f32[2,2,2,128], index: 1, kind: input, shape index: {}]
  %s2 = inlined_call_operand.hbm [shape: f32[2,3,2,128], index: 2, kind: output, shape index: {}]
  %s3 = sld [smem:[#allocation0]]
  $region26: #{tpu_custom_call.1} parent=0
    _
  %s5 = ssub.s32 1, %s3
  %s6 = scalar_select 0, %s5, %s3
  $region1: #{tpu_custom_call.1} parent=0
    #allocation2 [shape = 'u8[6144]{0}', space=vmem, size = 0x1800, scoped, tag = 'input window, operand 0, single buffered']
    #allocation3 [shape = 's32[1]{0}', space=sflag, size = 0x4, scoped, tag = 'scoped memory for tpu_custom_call.1']
    #allocation4 [shape = 's32[1]{0}', space=sflag, size = 0x4, scoped, tag = 'scoped memory for tpu_custom_call.1']
    #allocation5 [shape = 'u8[4096]{0}', space=vmem, size = 0x1000, scoped, tag = 'input window, operand 1, single buffered']
    #allocation6 [shape = 's32[1]{0}', space=sflag, size = 0x4, scoped, tag = 'scoped memory for tpu_custom_call.1']
    #allocation7 [shape = 'u8[6144]{0}', space=vmem, size = 0x1800, scoped, tag = 'output window, operand 0, single buffered']
    %7 = vsyncpa [#allocation3], 0
    %8 = vsyncpa [#allocation6], 0
    %9 = vsyncpa [#allocation4], 0
    // Predicated region
    $region2: #{tpu_custom_call.1} parent=1 // pred_check
      _
    $region3: #{tpu_custom_call.1} parent=1 // pred_check_branch
      %11 = sbr.rel (0) target = $region5
    $region4: #{tpu_custom_call.1} parent=1 // pred_region
      %13 = vsyncadd [#allocation3], 0
      %s14 = sshll.u32 %s0, 4
      %s15 = int_to_ptr.hbm [resolvable:$true] %s14
      %s16 = sshll.u32 [#allocation2], 4
      %s17 = int_to_ptr.vmem [resolvable:$true] %s16
      %22 = dma.hbm_to_vmem [thread:$0]  %s15, 192, %s17, [#allocation3], 32, 32, 2
    $region5: #{tpu_custom_call.1} parent=1 // pred_fallthru
      _
    // Predicated region
    $region6: #{tpu_custom_call.1} parent=1 // pred_check
      _
    $region7: #{tpu_custom_call.1} parent=1 // pred_check_branch
      %24 = sbr.rel (0) target = $region9
    $region8: #{tpu_custom_call.1} parent=1 // pred_region
      %26 = vsyncadd [#allocation6], 0
      %s27 = sshll.u32 %s1, 4
      %s28 = int_to_ptr.hbm [resolvable:$true] %s27
      %s29 = sshll.u32 [#allocation5], 4
      %s30 = int_to_ptr.vmem [resolvable:$true] %s29
      %35 = dma.hbm_to_vmem [thread:$0]  %s28, 128, %s30, [#allocation6], 32, 32, 2
    $region9: #{tpu_custom_call.1} parent=1 // pred_fallthru
      _
    // Predicated region
    $region10: #{tpu_custom_call.1} parent=1 // pred_check
      _
    $region11: #{tpu_custom_call.1} parent=1 // pred_check_branch
      %37 = sbr.rel (0) target = $region13
    $region12: #{tpu_custom_call.1} parent=1 // pred_region
      %39 = dma.done [#allocation3], 192
    $region13: #{tpu_custom_call.1} parent=1 // pred_fallthru
      _
    // Predicated region
    $region14: #{tpu_custom_call.1} parent=1 // pred_check
      _
    $region15: #{tpu_custom_call.1} parent=1 // pred_check_branch
      %41 = sbr.rel (0) target = $region17
    $region16: #{tpu_custom_call.1} parent=1 // pred_region
      %43 = dma.done [#allocation6], 128
    $region17: #{tpu_custom_call.1} parent=1 // pred_fallthru
      _
    %v44 = vld [vmem:[#allocation2] sm:$0x3]
    %v45 = vld [vmem:[#allocation2 + $0x6] sm:$0x3]
    %46 = vst [vmem:[#allocation7] sm:$0x3] %v44
    %47 = vst [vmem:[#allocation7 + $0x6] sm:$0x3] %v45
    %v48 = vld [vmem:[#allocation5] sm:$0x3]
    %v49 = vld [vmem:[#allocation5 + $0x2] sm:$0x3]
    %v50 = vld [vmem:[#allocation5 + $0x4] sm:$0x3]
    %v51 = vld [vmem:[#allocation5 + $0x6] sm:$0x3]
    %s52 = scalar_lea.vmem [#allocation2], 2
    %v53 = vld [vmem:[%s52] sm:$0x3]
    %v54 = vld [vmem:[%s52 + $0x2] sm:$0x3]
    %v55 = vld [vmem:[%s52 + $0x6] sm:$0x3]
    %v56 = vld [vmem:[%s52 + $0x8] sm:$0x3]
    %v57 = vmul.f32 %v48, %v53
    %v58 = vmul.f32 %v49, %v54
    %v59 = vmul.f32 %v50, %v55
    %v60 = vmul.f32 %v51, %v56
    %s61 = scalar_lea.vmem [#allocation7], 2
    %62 = vst [vmem:[%s61] sm:$0x3] %v57
    %63 = vst [vmem:[%s61 + $0x2] sm:$0x3] %v58
    %64 = vst [vmem:[%s61 + $0x6] sm:$0x3] %v59
    %65 = vst [vmem:[%s61 + $0x8] sm:$0x3] %v60
    // Predicated region
    $region18: #{tpu_custom_call.1} parent=1 // pred_check
      _
    $region19: #{tpu_custom_call.1} parent=1 // pred_check_branch
      %67 = sbr.rel (0) target = $region21
    $region20: #{tpu_custom_call.1} parent=1 // pred_region
      %69 = vsyncadd [#allocation4], 0
      %s70 = sshll.u32 [#allocation7], 4
      %s71 = int_to_ptr.vmem [resolvable:$true] %s70
      %s72 = sshll.u32 %s2, 4
      %s73 = int_to_ptr.hbm [resolvable:$true] %s72
      %78 = dma.vmem_to_hbm [thread:$0]  %s71, 192, %s73, [#allocation4], 32, 32, 2
    $region21: #{tpu_custom_call.1} parent=1 // pred_fallthru
      _
    // Predicated region
    $region22: #{tpu_custom_call.1} parent=1 // pred_check
      _
    $region23: #{tpu_custom_call.1} parent=1 // pred_check_branch
      %80 = sbr.rel (0) target = $region25
    $region24: #{tpu_custom_call.1} parent=1 // pred_region
      %82 = dma.done [#allocation4], 192
    $region25: #{tpu_custom_call.1} parent=1 // pred_fallthru
      _
    %83 = vsyncpa [#allocation3], 1
    %84 = vsyncpa [#allocation6], 1
    %85 = vsyncpa [#allocation4], 1

</llo_original>
